<compile_context>
chip_gen: v6e
topology: v6e:2x2x1
jax: 0.10.0
libtpu: 0.0.40
codegen_flags: <defaults>
</compile_context>

<pallas_src>
import jax
import jax.numpy as jnp
from jax.experimental import pallas as pl
from jax.experimental.pallas import tpu as pltpu


def _round_up(x, m):
    return ((x + m - 1) // m) * m


def linear_kernel(x_ref, wt_ref, b_ref, o_ref):
    # x_ref: (TM, D), wt_ref: (D, C_pad), b_ref: (1, C_pad), o_ref: (TM, C_pad)
    acc = jnp.dot(x_ref[...], wt_ref[...], preferred_element_type=jnp.float32)
    o_ref[...] = (acc + b_ref[...].astype(jnp.float32)).astype(o_ref.dtype)


def _vmem_capacity_bytes():
    try:
        return int(pltpu.get_tpu_info().vmem_capacity_bytes)
    except Exception:
        return 64 * 1024 * 1024  # conservative (v7x-sized) default


def _choose_tm(B, D, C_pad, x_bytes, out_bytes, w_bytes, vmem_cap):
    """Largest batch tile that fits the per-chip VMEM budget (biggest lever
    for this memory-bound kernel), split >=2 ways on 2-TC (v7x-like) chips."""
    if B <= 8:
        return B
    budget = min(int(vmem_cap * 0.45), 48 << 20)
    resident = (D * C_pad + 8 * C_pad) * w_bytes          # weight + bias (single-buf)
    per_row = 2 * (D * x_bytes + C_pad * out_bytes)       # double-buffered x & out
    avail = max(budget - resident, 8 * per_row)
    tm = int(avail // per_row)
    tm = max(8, min(tm, 1024))
    tm -= tm % 8
    # v7x heuristic: ~64 MiB VMEM per TC and 2 TCs/chip -> make sure the
    # "parallel" batch axis has >= 2 grid steps so both cores get work.
    if vmem_cap <= 64 * 1024 * 1024 and B >= 16:
        tm = min(tm, _round_up(pl.cdiv(B, 2), 8))
    tm = min(tm, max(8, (B // 8) * 8))  # partial last tile is fine
    return max(tm, 8)


def _vmem_limit_bytes(TM, D, C_pad, x_bytes, out_bytes, w_bytes, vmem_cap,
                      single_buffer_resident):
    resident_mult = 1 if single_buffer_resident else 2
    footprint = (resident_mult * (D * C_pad + 8 * C_pad) * w_bytes
                 + 2 * TM * (D * x_bytes + C_pad * out_bytes))
    limit = int(footprint * 1.25) + (4 << 20)
    limit = max(limit, 32 << 20)
    limit = min(limit, int(vmem_cap * 0.9))
    return limit


def logistic_regression_forward(x, weight, bias, *, compute_dtype=None,
                                force_kernel=False):
    """out = x @ weight.T + bias  (nn.Linear semantics); weight is (C, D)."""
    B, D = x.shape
    C, D2 = weight.shape
    assert D == D2, "weight must be (num_classes, input_size)"
    out_dtype = x.dtype

    # Tiny problems: pallas_call fixed overhead dominates; let XLA fuse it.
    if not force_kernel and (B * D < 32768 or B < 8):
        return (jnp.dot(x, weight.T, preferred_element_type=jnp.float32)
                + bias).astype(out_dtype)

    if compute_dtype is not None:
        x = x.astype(compute_dtype)
        weight = weight.astype(compute_dtype)

    # Lane padding only when C is already >= 128 (keeps stores unmasked at a
    # small relative cost); for small C a masked store beats an 8x padded
    # write + wrapper re-slice.
    if C >= 128 and C % 128 != 0:
        C_pad = _round_up(C, 128)
        weight = jnp.pad(weight, ((0, C_pad - C), (0, 0)))
        bias = jnp.pad(bias, (0, C_pad - C))
    else:
        C_pad = C

    wt = weight.T                               # one-time (D, C_pad) transpose
    b2d = bias.reshape(1, C_pad).astype(jnp.float32)

    x_bytes = x.dtype.itemsize
    w_bytes = wt.dtype.itemsize
    out_bytes = out_dtype.itemsize
    vmem_cap = _vmem_capacity_bytes()

    TM = _choose_tm(B, D, C_pad, x_bytes, out_bytes, w_bytes, vmem_cap)
    grid = (pl.cdiv(B, TM),)

    cost = pl.CostEstimate(
        flops=2 * B * D * C_pad,
        transcendentals=0,
        bytes_accessed=(B * D * x_bytes + D * C_pad * w_bytes
                        + C_pad * 4 + B * C_pad * out_bytes),
    )

    def _call(single_buffer_resident):
        resident_kwargs = (
            dict(pipeline_mode=pl.Buffered(1)) if single_buffer_resident else {})
        vmem_limit = _vmem_limit_bytes(TM, D, C_pad, x_bytes, out_bytes, w_bytes,
                                       vmem_cap, single_buffer_resident)
        out_pad = pl.pallas_call(
            linear_kernel,
            out_shape=jax.ShapeDtypeStruct((B, C_pad), out_dtype),
            grid=grid,
            in_specs=[
                pl.BlockSpec((TM, D), lambda i: (i, 0)),                 # streamed x
                pl.BlockSpec((D, C_pad), lambda i: (0, 0), **resident_kwargs),
                pl.BlockSpec((1, C_pad), lambda i: (0, 0), **resident_kwargs),
            ],
            out_specs=pl.BlockSpec((TM, C_pad), lambda i: (i, 0)),
            compiler_params=pltpu.CompilerParams(
                dimension_semantics=("parallel",),
                vmem_limit_bytes=vmem_limit,
            ),
            cost_estimate=cost,
        )(x, wt, b2d)
        return jax.block_until_ready(out_pad)

    try:
        out = _call(True)
    except Exception:
        # pipeline_mode=pl.Buffered(1) unsupported on this jax build -> default
        # double-buffered resident operands (correct, slightly more VMEM).
        out = _call(False)

    return out[:, :C] if C_pad != C else out


if __name__ == "__main__":
    def make_inputs(key, batch, input_size, num_classes):
        kx, kw, kb = jax.random.split(key, 3)
        xv = jax.random.normal(kx, (batch, input_size), dtype=jnp.float32)
        bound = 1.0 / (input_size ** 0.5)   # mimic nn.Linear init range
        wv = jax.random.uniform(kw, (num_classes, input_size), dtype=jnp.float32,
                                minval=-bound, maxval=bound)
        bv = jax.random.uniform(kb, (num_classes,), dtype=jnp.float32,
                                minval=-bound, maxval=bound)
        return xv, wv, bv

    # 1) Spec-small shapes (batch=8, input_size=32, num_classes=16), forced
    #    through the Pallas kernel.
    x, w, b = make_inputs(jax.random.PRNGKey(0), 8, 32, 16)
    out = jax.block_until_ready(
        logistic_regression_forward(x, w, b, force_kernel=True))
    ref = x @ w.T + b
    assert out.shape == ref.shape
    assert jnp.allclose(out, ref, atol=1e-5, rtol=1e-5), "small-shape mismatch"

    # 2) Multi-row batch (matches the module's BS=1024 prediction batching)
    #    with a non-lane-aligned class dim >= 128, exercising the multi-tile /
    #    pad-and-slice path on the auto-tiled grid.
    x2, w2, b2 = make_inputs(jax.random.PRNGKey(1), 1024, 64, 200)
    out2 = jax.block_until_ready(logistic_regression_forward(x2, w2, b2))
    ref2 = x2 @ w2.T + b2
    assert out2.shape == ref2.shape
    assert jnp.allclose(out2, ref2, atol=1e-4, rtol=1e-4), "multi-tile mismatch"

    print("KERNEL_OK")
</pallas_src>

<mosaic_0001>
module attributes {stable_mosaic.version = 11 : i64} {
  func.func @linear_kernel(%arg0: i32, %arg1: memref<8x32xf32, #tpu.memory_space<vmem>>, %arg2: memref<32x16xf32, #tpu.memory_space<vmem>>, %arg3: memref<1x16xf32, #tpu.memory_space<vmem>>, %arg4: memref<8x16xf32, #tpu.memory_space<vmem>>) attributes {dimension_semantics = [#tpu.dimension_semantics<parallel>], iteration_bounds = array<i64: 1>, scalar_prefetch = 0 : i64, scratch_operands = 0 : i64, tpu.core_type = #tpu.core_type<tc>, window_params = [{transform_indices = @transform_0, window_bounds = array<i64: 8, 32>}, {pipeline_mode = #tpu.pipeline_mode<synchronous>, transform_indices = @transform_1, window_bounds = array<i64: 32, 16>}, {pipeline_mode = #tpu.pipeline_mode<synchronous>, transform_indices = @transform_2, window_bounds = array<i64: 1, 16>}, {transform_indices = @transform_3, window_bounds = array<i64: 8, 16>}]} {
    %c0 = arith.constant 0 : index
    %c0_0 = arith.constant 0 : index
    %0 = vector.load %arg1[%c0, %c0_0] : memref<8x32xf32, #tpu.memory_space<vmem>>, vector<8x32xf32>
    %c0_1 = arith.constant 0 : index
    %c0_2 = arith.constant 0 : index
    %1 = vector.load %arg2[%c0_1, %c0_2] : memref<32x16xf32, #tpu.memory_space<vmem>>, vector<32x16xf32>
    %cst = arith.constant dense<0.000000e+00> : vector<8x16xf32>
    %2 = tpu.matmul %0, %1, %cst {dimension_numbers = #tpu.dot_dimension_numbers<[1], [0], [0], [1], [0, 0, 1, 1], [], []>} : vector<8x32xf32>, vector<32x16xf32>, vector<8x16xf32> -> vector<8x16xf32>
    %c0_3 = arith.constant 0 : index
    %c0_4 = arith.constant 0 : index
    %3 = vector.load %arg3[%c0_3, %c0_4] : memref<1x16xf32, #tpu.memory_space<vmem>>, vector<1x16xf32>
    %4 = vector.broadcast %3 : vector<1x16xf32> to vector<8x16xf32>
    %5 = arith.addf %2, %4 : vector<8x16xf32>
    %c0_5 = arith.constant 0 : index
    %c0_6 = arith.constant 0 : index
    %6 = vector.load %arg4[%c0_5, %c0_6] : memref<8x16xf32, #tpu.memory_space<vmem>>, vector<8x16xf32>
    tpu.vector_store %arg4[%c0_5, %c0_6], %5 {strides = array<i32>} : memref<8x16xf32, #tpu.memory_space<vmem>>, vector<8x16xf32>,
    return
  }
  func.func @transform_0(%arg0: i32) -> (i32, i32) {
    %c0_i32 = arith.constant 0 : i32
    %c0_i32_0 = arith.constant 0 : i32
    return %arg0, %c0_i32 : i32, i32
  }
  func.func @transform_1(%arg0: i32) -> (i32, i32) {
    %c0_i32 = arith.constant 0 : i32
    %c0_i32_0 = arith.constant 0 : i32
    %c0_i32_1 = arith.constant 0 : i32
    return %c0_i32, %c0_i32_0 : i32, i32
  }
  func.func @transform_2(%arg0: i32) -> (i32, i32) {
    %c0_i32 = arith.constant 0 : i32
    %c0_i32_0 = arith.constant 0 : i32
    %c0_i32_1 = arith.constant 0 : i32
    return %c0_i32, %c0_i32_0 : i32, i32
  }
  func.func @transform_3(%arg0: i32) -> (i32, i32) {
    %c0_i32 = arith.constant 0 : i32
    %c0_i32_0 = arith.constant 0 : i32
    return %arg0, %c0_i32 : i32, i32
  }
}

module attributes {stable_mosaic.version = 11 : i64} {
  func.func @linear_kernel(%arg0: i32, %arg1: memref<8x32xf32, #tpu.memory_space<vmem>>, %arg2: memref<32x16xf32, #tpu.memory_space<vmem>>, %arg3: memref<1x16xf32, #tpu.memory_space<vmem>>, %arg4: memref<8x16xf32, #tpu.memory_space<vmem>>) attributes {dimension_semantics = [#tpu.dimension_semantics<parallel>], iteration_bounds = array<i64: 1>, scalar_prefetch = 0 : i64, scratch_operands = 0 : i64, tpu.core_type = #tpu.core_type<tc>, window_params = [{transform_indices = @transform_0, window_bounds = array<i64: 8, 32>}, {pipeline_mode = #tpu.pipeline_mode<synchronous>, transform_indices = @transform_1, window_bounds = array<i64: 32, 16>}, {pipeline_mode = #tpu.pipeline_mode<synchronous>, transform_indices = @transform_2, window_bounds = array<i64: 1, 16>}, {transform_indices = @transform_3, window_bounds = array<i64: 8, 16>}]} {
    %c0 = arith.constant 0 : index
    %c0_0 = arith.constant 0 : index
    %0 = vector.load %arg1[%c0, %c0_0] : memref<8x32xf32, #tpu.memory_space<vmem>>, vector<8x32xf32>
    %c0_1 = arith.constant 0 : index
    %c0_2 = arith.constant 0 : index
    %1 = vector.load %arg2[%c0_1, %c0_2] : memref<32x16xf32, #tpu.memory_space<vmem>>, vector<32x16xf32>
    %cst = arith.constant dense<0.000000e+00> : vector<8x16xf32>
    %2 = tpu.matmul %0, %1, %cst {dimension_numbers = #tpu.dot_dimension_numbers<[1], [0], [0], [1], [0, 0, 1, 1], [], []>} : vector<8x32xf32>, vector<32x16xf32>, vector<8x16xf32> -> vector<8x16xf32>
    %c0_3 = arith.constant 0 : index
    %c0_4 = arith.constant 0 : index
    %3 = vector.load %arg3[%c0_3, %c0_4] : memref<1x16xf32, #tpu.memory_space<vmem>>, vector<1x16xf32>
    %4 = vector.broadcast %3 : vector<1x16xf32> to vector<8x16xf32>
    %5 = arith.addf %2, %4 : vector<8x16xf32>
    %c0_5 = arith.constant 0 : index
    %c0_6 = arith.constant 0 : index
    %6 = vector.load %arg4[%c0_5, %c0_6] : memref<8x16xf32, #tpu.memory_space<vmem>>, vector<8x16xf32>
    tpu.vector_store %arg4[%c0_5, %c0_6], %5 {strides = array<i32>} : memref<8x16xf32, #tpu.memory_space<vmem>>, vector<8x16xf32>,
    return
  }
  func.func @transform_0(%arg0: i32) -> (i32, i32) {
    %c0_i32 = arith.constant 0 : i32
    %c0_i32_0 = arith.constant 0 : i32
    return %arg0, %c0_i32 : i32, i32
  }
  func.func @transform_1(%arg0: i32) -> (i32, i32) {
    %c0_i32 = arith.constant 0 : i32
    %c0_i32_0 = arith.constant 0 : i32
    %c0_i32_1 = arith.constant 0 : i32
    return %c0_i32, %c0_i32_0 : i32, i32
  }
  func.func @transform_2(%arg0: i32) -> (i32, i32) {
    %c0_i32 = arith.constant 0 : i32
    %c0_i32_0 = arith.constant 0 : i32
    %c0_i32_1 = arith.constant 0 : i32
    return %c0_i32, %c0_i32_0 : i32, i32
  }
  func.func @transform_3(%arg0: i32) -> (i32, i32) {
    %c0_i32 = arith.constant 0 : i32
    %c0_i32_0 = arith.constant 0 : i32
    return %arg0, %c0_i32 : i32, i32
  }
}

</mosaic_0001>

<llo_original>
// kernel: tpu_custom_call.1
$region0: #{tpu_custom_call.1}
  #allocation0 [shape = 'u32[]', space=smem, size = 0x4, offset = 0x4, fixed_abs, tag = 'smem constant byte address 0x4 - core index']
  #allocation1 [shape = 'u32[144,128]{1,0:T(1,128)}', space=vmem, size = 0x12000, scoped, tag = 'internal scratch']
  %s0 = inlined_call_operand.vmem [shape: f32[8,32], index: 0, kind: input, shape index: {}]
  %s1 = inlined_call_operand.vmem [shape: f32[32,16], index: 1, kind: input, shape index: {}]
  %s2 = inlined_call_operand.vmem [shape: f32[1,16], index: 2, kind: input, shape index: {}]
  %s3 = inlined_call_operand.hbm [shape: f32[8,16], index: 3, kind: output, shape index: {}]
  %s4 = sld [smem:[#allocation0]]
  $region22: #{tpu_custom_call.1} parent=0
    _
  %s6 = ssub.s32 1, %s4
  %s7 = scalar_select 0, %s6, %s4
  $region1: #{tpu_custom_call.1} parent=0
    #allocation2 [shape = 'u8[4096]{0}', space=vmem, size = 0x1000, scoped, tag = 'output window, operand 0, single buffered']
    #allocation3 [shape = 's32[1]{0}', space=sflag, size = 0x4, scoped, tag = 'scoped memory for tpu_custom_call.1']
    %8 = vsyncpa [#allocation3], 0
    // Predicated region
    $region2: #{tpu_custom_call.1} parent=1 // pred_check
      _
    $region3: #{tpu_custom_call.1} parent=1 // pred_check_branch
      %10 = sbr.rel (0) target = $region5
    $region4: #{tpu_custom_call.1} parent=1 // pred_region
      _
    $region5: #{tpu_custom_call.1} parent=1 // pred_fallthru
      _
    // Predicated region
    $region6: #{tpu_custom_call.1} parent=1 // pred_check
      _
    $region7: #{tpu_custom_call.1} parent=1 // pred_check_branch
      %12 = sbr.rel (0) target = $region9
    $region8: #{tpu_custom_call.1} parent=1 // pred_region
      _
    $region9: #{tpu_custom_call.1} parent=1 // pred_fallthru
      _
    // Predicated region
    $region10: #{tpu_custom_call.1} parent=1 // pred_check
      _
    $region11: #{tpu_custom_call.1} parent=1 // pred_check_branch
      %14 = sbr.rel (0) target = $region13
    $region12: #{tpu_custom_call.1} parent=1 // pred_region
      _
    $region13: #{tpu_custom_call.1} parent=1 // pred_fallthru
      _
    %v15 = vld [vmem:[%s0] sm:$0xff]
    %v16 = vld [vmem:[%s1] sm:$0xff]
    %v17 = vld [vmem:[%s1 + $0x8] sm:$0xff]
    %v18 = vld [vmem:[%s1 + $0x10] sm:$0xff]
    %v19 = vld [vmem:[%s1 + $0x18] sm:$0xff]
    %v20 = vld [vmem:[%s2] sm:$0x1]
    %v22 = vlaneseq
    %v23 = vshrl.u32 %v22, 7
    %v24 = vsub.s32 0, %v23
    %v25 = vrot.slane %v20, %v24
    %vm27 = vcmask 261120
    %v29 = vsel %vm27, %v15, 0
    %31 = vmatprep.subr.mxu0 0.0
    %32 = vmatpush1.msra.mxu0 0.0
    %33 = vmatprep.subr.mxu0 0.0
    %34 = vmatpush1.msra.mxu0 0.0
    %35 = vmatprep.subr.mxu0 0.0
    %36 = vmatpush1.msra.mxu0 0.0
    %37 = vmatprep.subr.mxu0 0.0
    %38 = vmatpush1.msra.mxu0 0.0
    %39 = vmatprep.subr.mxu0 0.0
    %40 = vmatpush1.msra.mxu0 0.0
    %41 = vmatprep.subr.mxu0 0.0
    %42 = vmatpush1.msra.mxu0 0.0
    %43 = vmatprep.subr.mxu0 0.0
    %44 = vmatpush1.msra.mxu0 0.0
    %45 = vmatprep.subr.mxu0 0.0
    %46 = vmatpush1.msra.mxu0 0.0
    %47 = vmatprep.subr.mxu0 0.0
    %48 = vmatpush1.msra.mxu0 0.0
    %49 = vmatprep.subr.mxu0 0.0
    %50 = vmatpush1.msra.mxu0 0.0
    %51 = vmatprep.subr.mxu0 0.0
    %52 = vmatpush1.msra.mxu0 0.0
    %53 = vmatprep.subr.mxu0 0.0
    %54 = vmatpush1.msra.mxu0 0.0
    %55 = vmatprep.subr.mxu0 0.0
    %56 = vmatpush1.msra.mxu0 %v19
    %57 = vmatprep.subr.mxu0 0.0
    %58 = vmatpush1.msra.mxu0 %v18
    %59 = vmatprep.subr.mxu0 0.0
    %60 = vmatpush1.msra.mxu0 %v17
    %61 = vmatprep.subr.mxu0 0.0
    %62 = vmatpush1.msra.mxu0 %v16
    %63 = vmatprep.subr.mxu0 0.0
    %64 = vmatpush2.msra.mxu0 0.0
    %65 = vmatprep.subr.mxu0 0.0
    %66 = vmatpush2.msra.mxu0 0.0
    %67 = vmatprep.subr.mxu0 0.0
    %68 = vmatpush2.msra.mxu0 0.0
    %69 = vmatprep.subr.mxu0 0.0
    %70 = vmatpush2.msra.mxu0 0.0
    %71 = vmatprep.subr.mxu0 0.0
    %72 = vmatpush2.msra.mxu0 0.0
    %73 = vmatprep.subr.mxu0 0.0
    %74 = vmatpush2.msra.mxu0 0.0
    %75 = vmatprep.subr.mxu0 0.0
    %76 = vmatpush2.msra.mxu0 0.0
    %77 = vmatprep.subr.mxu0 0.0
    %78 = vmatpush2.msra.mxu0 0.0
    %79 = vmatprep.subr.mxu0 0.0
    %80 = vmatpush2.msra.mxu0 0.0
    %81 = vmatprep.subr.mxu0 0.0
    %82 = vmatpush2.msra.mxu0 0.0
    %83 = vmatprep.subr.mxu0 0.0
    %84 = vmatpush2.msra.mxu0 0.0
    %85 = vmatprep.subr.mxu0 0.0
    %86 = vmatpush2.msra.mxu0 0.0
    %87 = vmatprep.subr.mxu0 0.0
    %88 = vmatpush2.msra.mxu0 0.0
    %89 = vmatprep.subr.mxu0 0.0
    %90 = vmatpush2.msra.mxu0 0.0
    %91 = vmatprep.subr.mxu0 0.0
    %92 = vmatpush2.msra.mxu0 0.0
    %93 = vmatprep.subr.mxu0 0.0
    %94 = vmatpush2.msra.mxu0 0.0
    %95 = vmatprep.mubr.f32.mxu0 0.0
    %96 = vmatmul.mubr.f32.gmra.mxu0 %v29
    %v97 = vpop.f32.mrf.mxu0
    %v98 = vadd.f32 %v25, %v97
    %v99 = vpop.f32.mrf.mxu0
    %100 = vdwg.mxu0
    %vm101 = vcmask 130048
    %102 = vst.msk [vmem:[#allocation2] sm:$0xff] %vm101, %v98
    // Predicated region
    $region14: #{tpu_custom_call.1} parent=1 // pred_check
      _
    $region15: #{tpu_custom_call.1} parent=1 // pred_check_branch
      %104 = sbr.rel (0) target = $region17
    $region16: #{tpu_custom_call.1} parent=1 // pred_region
      %s106 = ssub.s32 128, 128
      %107 = vsyncadd [#allocation3], %s106
      %s109 = sshll.u32 [#allocation2], 4
      %s110 = int_to_ptr.vmem [resolvable:$true] %s109
      %112 = dma.vmem_to_hbm [thread:$0]  %s110, 128, %s3, [#allocation3]
    $region17: #{tpu_custom_call.1} parent=1 // pred_fallthru
      _
    // Predicated region
    $region18: #{tpu_custom_call.1} parent=1 // pred_check
      _
    $region19: #{tpu_custom_call.1} parent=1 // pred_check_branch
      %114 = sbr.rel (0) target = $region21
    $region20: #{tpu_custom_call.1} parent=1 // pred_region
      %115 = dma.done [#allocation3], 128
    $region21: #{tpu_custom_call.1} parent=1 // pred_fallthru
      _
    %116 = vsyncpa [#allocation3], 1

// kernel: tpu_custom_call.1
$region0: #{tpu_custom_call.1}
  #allocation0 [shape = 'u32[]', space=smem, size = 0x4, offset = 0x4, fixed_abs, tag = 'smem constant byte address 0x4 - core index']
  #allocation1 [shape = 'u32[144,128]{1,0:T(1,128)}', space=vmem, size = 0x12000, scoped, tag = 'internal scratch']
  %s0 = inlined_call_operand.vmem [shape: f32[8,32], index: 0, kind: input, shape index: {}]
  %s1 = inlined_call_operand.vmem [shape: f32[32,16], index: 1, kind: input, shape index: {}]
  %s2 = inlined_call_operand.vmem [shape: f32[1,16], index: 2, kind: input, shape index: {}]
  %s3 = inlined_call_operand.hbm [shape: f32[8,16], index: 3, kind: output, shape index: {}]
  %s4 = sld [smem:[#allocation0]]
  $region22: #{tpu_custom_call.1} parent=0
    _
  %s6 = ssub.s32 1, %s4
  %s7 = scalar_select 0, %s6, %s4
  $region1: #{tpu_custom_call.1} parent=0
    #allocation2 [shape = 'u8[4096]{0}', space=vmem, size = 0x1000, scoped, tag = 'output window, operand 0, single buffered']
    #allocation3 [shape = 's32[1]{0}', space=sflag, size = 0x4, scoped, tag = 'scoped memory for tpu_custom_call.1']
    %8 = vsyncpa [#allocation3], 0
    // Predicated region
    $region2: #{tpu_custom_call.1} parent=1 // pred_check
      _
    $region3: #{tpu_custom_call.1} parent=1 // pred_check_branch
      %10 = sbr.rel (0) target = $region5
    $region4: #{tpu_custom_call.1} parent=1 // pred_region
      _
    $region5: #{tpu_custom_call.1} parent=1 // pred_fallthru
      _
    // Predicated region
    $region6: #{tpu_custom_call.1} parent=1 // pred_check
      _
    $region7: #{tpu_custom_call.1} parent=1 // pred_check_branch
      %12 = sbr.rel (0) target = $region9
    $region8: #{tpu_custom_call.1} parent=1 // pred_region
      _
    $region9: #{tpu_custom_call.1} parent=1 // pred_fallthru
      _
    // Predicated region
    $region10: #{tpu_custom_call.1} parent=1 // pred_check
      _
    $region11: #{tpu_custom_call.1} parent=1 // pred_check_branch
      %14 = sbr.rel (0) target = $region13
    $region12: #{tpu_custom_call.1} parent=1 // pred_region
      _
    $region13: #{tpu_custom_call.1} parent=1 // pred_fallthru
      _
    %v15 = vld [vmem:[%s0] sm:$0xff]
    %v16 = vld [vmem:[%s1] sm:$0xff]
    %v17 = vld [vmem:[%s1 + $0x8] sm:$0xff]
    %v18 = vld [vmem:[%s1 + $0x10] sm:$0xff]
    %v19 = vld [vmem:[%s1 + $0x18] sm:$0xff]
    %v20 = vld [vmem:[%s2] sm:$0x1]
    %v22 = vlaneseq
    %v23 = vshrl.u32 %v22, 7
    %v24 = vsub.s32 0, %v23
    %v25 = vrot.slane %v20, %v24
    %vm27 = vcmask 261120
    %v29 = vsel %vm27, %v15, 0
    %31 = vmatprep.subr.mxu0 0.0
    %32 = vmatpush1.msra.mxu0 0.0
    %33 = vmatprep.subr.mxu0 0.0
    %34 = vmatpush1.msra.mxu0 0.0
    %35 = vmatprep.subr.mxu0 0.0
    %36 = vmatpush1.msra.mxu0 0.0
    %37 = vmatprep.subr.mxu0 0.0
    %38 = vmatpush1.msra.mxu0 0.0
    %39 = vmatprep.subr.mxu0 0.0
    %40 = vmatpush1.msra.mxu0 0.0
    %41 = vmatprep.subr.mxu0 0.0
    %42 = vmatpush1.msra.mxu0 0.0
    %43 = vmatprep.subr.mxu0 0.0
    %44 = vmatpush1.msra.mxu0 0.0
    %45 = vmatprep.subr.mxu0 0.0
    %46 = vmatpush1.msra.mxu0 0.0
    %47 = vmatprep.subr.mxu0 0.0
    %48 = vmatpush1.msra.mxu0 0.0
    %49 = vmatprep.subr.mxu0 0.0
    %50 = vmatpush1.msra.mxu0 0.0
    %51 = vmatprep.subr.mxu0 0.0
    %52 = vmatpush1.msra.mxu0 0.0
    %53 = vmatprep.subr.mxu0 0.0
    %54 = vmatpush1.msra.mxu0 0.0
    %55 = vmatprep.subr.mxu0 0.0
    %56 = vmatpush1.msra.mxu0 %v19
    %57 = vmatprep.subr.mxu0 0.0
    %58 = vmatpush1.msra.mxu0 %v18
    %59 = vmatprep.subr.mxu0 0.0
    %60 = vmatpush1.msra.mxu0 %v17
    %61 = vmatprep.subr.mxu0 0.0
    %62 = vmatpush1.msra.mxu0 %v16
    %63 = vmatprep.subr.mxu0 0.0
    %64 = vmatpush2.msra.mxu0 0.0
    %65 = vmatprep.subr.mxu0 0.0
    %66 = vmatpush2.msra.mxu0 0.0
    %67 = vmatprep.subr.mxu0 0.0
    %68 = vmatpush2.msra.mxu0 0.0
    %69 = vmatprep.subr.mxu0 0.0
    %70 = vmatpush2.msra.mxu0 0.0
    %71 = vmatprep.subr.mxu0 0.0
    %72 = vmatpush2.msra.mxu0 0.0
    %73 = vmatprep.subr.mxu0 0.0
    %74 = vmatpush2.msra.mxu0 0.0
    %75 = vmatprep.subr.mxu0 0.0
    %76 = vmatpush2.msra.mxu0 0.0
    %77 = vmatprep.subr.mxu0 0.0
    %78 = vmatpush2.msra.mxu0 0.0
    %79 = vmatprep.subr.mxu0 0.0
    %80 = vmatpush2.msra.mxu0 0.0
    %81 = vmatprep.subr.mxu0 0.0
    %82 = vmatpush2.msra.mxu0 0.0
    %83 = vmatprep.subr.mxu0 0.0
    %84 = vmatpush2.msra.mxu0 0.0
    %85 = vmatprep.subr.mxu0 0.0
    %86 = vmatpush2.msra.mxu0 0.0
    %87 = vmatprep.subr.mxu0 0.0
    %88 = vmatpush2.msra.mxu0 0.0
    %89 = vmatprep.subr.mxu0 0.0
    %90 = vmatpush2.msra.mxu0 0.0
    %91 = vmatprep.subr.mxu0 0.0
    %92 = vmatpush2.msra.mxu0 0.0
    %93 = vmatprep.subr.mxu0 0.0
    %94 = vmatpush2.msra.mxu0 0.0
    %95 = vmatprep.mubr.f32.mxu0 0.0
    %96 = vmatmul.mubr.f32.gmra.mxu0 %v29
    %v97 = vpop.f32.mrf.mxu0
    %v98 = vadd.f32 %v25, %v97
    %v99 = vpop.f32.mrf.mxu0
    %100 = vdwg.mxu0
    %vm101 = vcmask 130048
    %102 = vst.msk [vmem:[#allocation2] sm:$0xff] %vm101, %v98
    // Predicated region
    $region14: #{tpu_custom_call.1} parent=1 // pred_check
      _
    $region15: #{tpu_custom_call.1} parent=1 // pred_check_branch
      %104 = sbr.rel (0) target = $region17
    $region16: #{tpu_custom_call.1} parent=1 // pred_region
      %s106 = ssub.s32 128, 128
      %107 = vsyncadd [#allocation3], %s106
      %s109 = sshll.u32 [#allocation2], 4
      %s110 = int_to_ptr.vmem [resolvable:$true] %s109
      %112 = dma.vmem_to_hbm [thread:$0]  %s110, 128, %s3, [#allocation3]
    $region17: #{tpu_custom_call.1} parent=1 // pred_fallthru
      _
    // Predicated region
    $region18: #{tpu_custom_call.1} parent=1 // pred_check
      _
    $region19: #{tpu_custom_call.1} parent=1 // pred_check_branch
      %114 = sbr.rel (0) target = $region21
    $region20: #{tpu_custom_call.1} parent=1 // pred_region
      %115 = dma.done [#allocation3], 128
    $region21: #{tpu_custom_call.1} parent=1 // pred_fallthru
      _
    %116 = vsyncpa [#allocation3], 1

</llo_original>
